<compile_context>
chip_gen: v5e
topology: v5e:2x2
jax: 0.10.0
libtpu: 0.0.40
codegen_flags: <defaults>
</compile_context>

<pallas_src>
import jax
import jax.numpy as jnp
from jax import lax
from jax.experimental import pallas as pl
from jax.experimental.pallas import tpu as pltpu


_VMEM_LIMIT_BYTES = 64 * 1024 * 1024  # headroom for tr=128 tiles on all gens


# ---------------------------------------------------------------------------
# Kernel 1 (fused hot path): vocab projection + log_softmax + per-token NLL.
# ---------------------------------------------------------------------------
def _fused_xe_kernel(x_ref, w_ref, b_ref, tgt_ref, msk_ref, logp_ref, nll_ref):
    # x:(TR,D) bf16, w:(D,V) bf16, b:(1,V) f32, tgt:(TR,1) i32, msk:(TR,1) f32
    logits = jnp.dot(x_ref[...], w_ref[...],
                     preferred_element_type=jnp.float32) + b_ref[...]
    m = jnp.max(logits, axis=-1, keepdims=True)
    z = logits - m
    lse = jnp.log(jnp.sum(jnp.exp(z), axis=-1, keepdims=True))
    logp = z - lse                                          # (TR, V) f32
    # TODO(synk): store bf16 here if downstream consumers of model_output
    # tolerate it -- halves the dominant HBM write traffic.
    logp_ref[...] = logp

    # Criterion epilogue (LanguageModelCriterion gather), on logits already in
    # vregs: one-hot compare (no dynamic gather on TPU), mask, per-row NLL.
    tr, v = logp.shape
    col = lax.broadcasted_iota(jnp.int32, (tr, v), 1)
    picked = jnp.where(col == tgt_ref[...], logp, 0.0)
    gathered = jnp.sum(picked, axis=-1, keepdims=True)      # (TR, 1)
    nll_ref[...] = -gathered * msk_ref[...]


def fused_proj_logsoftmax_nll(x, w, b, target, mask, *, tr=128):
    """x:(NL,D) bf16, w:(D,V) bf16, b:(1,V) f32, target/mask:(NL,1).

    Returns (log_probs (NL,V) f32, per-row masked NLL (NL,1) f32)."""
    nl, d = x.shape
    v = w.shape[1]
    grid = (pl.cdiv(nl, tr),)
    return pl.pallas_call(
        _fused_xe_kernel,
        out_shape=(jax.ShapeDtypeStruct((nl, v), jnp.float32),
                   jax.ShapeDtypeStruct((nl, 1), jnp.float32)),
        grid_spec=pltpu.PrefetchScalarGridSpec(
            num_scalar_prefetch=0,
            grid=grid,
            in_specs=[
                pl.BlockSpec((tr, d), lambda i: (i, 0)),
                # Constant index_map -> Pallas re-fetches W/b only when the
                # block index changes, i.e. never.  At real vocab sizes keep
                # them bf16 (done) or tile V with an online logsumexp to
                # respect v7x's 64 MiB VMEM.
                pl.BlockSpec((d, v), lambda i: (0, 0)),
                pl.BlockSpec((1, v), lambda i: (0, 0)),
                # target/mask are tiny (tr*4 contiguous bytes per step); kept
                # as (tr,1) columns because the one-hot compare needs them
                # sublane-aligned with the (tr,V) logits anyway.
                pl.BlockSpec((tr, 1), lambda i: (i, 0)),
                pl.BlockSpec((tr, 1), lambda i: (i, 0)),
            ],
            out_specs=(
                pl.BlockSpec((tr, v), lambda i: (i, 0)),
                pl.BlockSpec((tr, 1), lambda i: (i, 0)),
            ),
        ),
        compiler_params=pltpu.CompilerParams(
            dimension_semantics=("parallel",),
            vmem_limit_bytes=_VMEM_LIMIT_BYTES),
    )(x, w, b, target, mask)


# ---------------------------------------------------------------------------
# Kernel 2: standalone LanguageModelCriterion gather (spec module) for
# already-materialized log-probs.  Emits per-row masked NLL; the cheap final
# reductions ('mean' or 'none') are done in JAX.
# ---------------------------------------------------------------------------
def _nll_rows_kernel(logp_ref, tgt_ref, msk_ref, nll_ref):
    logp = logp_ref[...].astype(jnp.float32)                # (TR, V)
    tr, v = logp.shape
    col = lax.broadcasted_iota(jnp.int32, (tr, v), 1)
    picked = jnp.where(col == tgt_ref[...], logp, 0.0)
    gathered = jnp.sum(picked, axis=-1, keepdims=True)      # (TR, 1)
    nll_ref[...] = -gathered * msk_ref[...]


def _masked_nll_rows(logp, target, mask, *, tr=128):
    nl, v = logp.shape
    grid = (pl.cdiv(nl, tr),)
    return pl.pallas_call(
        _nll_rows_kernel,
        out_shape=jax.ShapeDtypeStruct((nl, 1), jnp.float32),
        grid_spec=pltpu.PrefetchScalarGridSpec(
            num_scalar_prefetch=0,
            grid=grid,
            in_specs=[
                pl.BlockSpec((tr, v), lambda i: (i, 0)),
                pl.BlockSpec((tr, 1), lambda i: (i, 0)),
                pl.BlockSpec((tr, 1), lambda i: (i, 0)),
            ],
            out_specs=pl.BlockSpec((tr, 1), lambda i: (i, 0)),
        ),
        compiler_params=pltpu.CompilerParams(
            dimension_semantics=("parallel",),
            vmem_limit_bytes=_VMEM_LIMIT_BYTES),
    )(logp, target, mask)


class LanguageModelCriterionPallas:
    """Pallas port of LanguageModelCriterion.forward (both reductions)."""

    def __call__(self, input, target, mask, reduction='mean'):
        if target.ndim == 3:
            target = target.reshape(-1, target.shape[2])
            mask = mask.reshape(-1, mask.shape[2])
        n, l = input.shape[:2]
        v = input.shape[2]
        target = target[:, :l].astype(jnp.int32)
        mask = mask[:, :l].astype(jnp.float32)
        nll = _masked_nll_rows(input.reshape(n * l, v),
                               target.reshape(n * l, 1),
                               mask.reshape(n * l, 1))
        nll = nll.reshape(n, l)
        # NOTE: like the PyTorch original, a fully-masked batch/sequence gives
        # 0/0 -> NaN; semantics intentionally preserved.
        if reduction == 'none':
            return nll.sum(axis=1) / mask.sum(axis=1)
        return nll.sum() / mask.sum()


# ---------------------------------------------------------------------------
# LossWrapper forward (sc_flag=False, struc_flag=False, drop_worst_flag=False)
# ---------------------------------------------------------------------------
class LossWrapperPallas:
    """Stand-in for LossWrapper with a deterministic synthetic model.

    params:
      emb      : (V, D)   token embedding table (f32)
      fc_proj  : (Dfc, D) projects fc_feats into decoder hidden space (f32)
      w_out    : (D, V)   output vocab projection weight (bf16, MXU operand)
      b_out    : (1, V)   output vocab projection bias (f32)
    """

    def __init__(self, V, D, Dfc, key):
        k1, k2, k3 = jax.random.split(key, 3)
        self.V, self.D, self.Dfc = V, D, Dfc
        self.emb = jax.random.normal(k1, (V, D), jnp.float32) * 0.02
        self.fc_proj = jax.random.normal(k2, (Dfc, D), jnp.float32) * 0.02
        self.w_out = (jax.random.normal(k3, (D, V), jnp.float32)
                      * 0.02).astype(jnp.bfloat16)
        self.b_out = jnp.zeros((1, V), jnp.float32)
        self.crit = LanguageModelCriterionPallas()

    def _hidden_states(self, fc_feats, labels_in):
        # TODO(synk): the real captioning model (encoder/decoder, prototype
        # alignment heads, concept predictors) is not replicable here; a
        # deterministic embed + fc-conditioned hidden state stands in.
        n, l = labels_in.shape
        h = jnp.take(self.emb, labels_in, axis=0)           # (N, L, D)
        h = h + (fc_feats @ self.fc_proj)[:, None, :]
        return h.reshape(n * l, self.D)

    def forward(self, prototypes_text, prototypes_visual, fc_feats, att_feats,
                labels, masks, att_masks, gts, gt_indices,
                sc_flag=False, struc_flag=False, drop_worst_flag=False):
        assert not sc_flag and not struc_flag and not drop_worst_flag, \
            "only the standard XE branch is implemented"
        out = {}
        n, lp1 = labels.shape
        l = lp1 - 1

        x = self._hidden_states(fc_feats, labels[..., :-1]).astype(jnp.bfloat16)
        target = labels[..., 1:].astype(jnp.int32)           # (N, L)
        mask = masks[..., 1:].astype(jnp.float32)            # (N, L)

        # Fused hot path: projection + log_softmax + criterion gather in one
        # kernel; the (NL, V) log-probs are written to HBM once, never re-read.
        logp, nll_rows = fused_proj_logsoftmax_nll(
            x, self.w_out, self.b_out,
            target.reshape(n * l, 1), mask.reshape(n * l, 1))
        model_output = logp.reshape(n, l, self.V)
        loss = nll_rows.sum() / mask.sum()    # LanguageModelCriterion, 'mean'

        out['model_output'] = model_output
        out['feature_decoder'] = None    # placeholders for model internals
        out['feature_encoder'] = None
        out['label'] = labels
        out['mid_token_visual'] = None
        out['mid_token_text'] = None
        out['visual_concept_predict'] = None
        out['text_concept_predict'] = None
        out['loss'] = loss
        return out


# ---------------------------------------------------------------------------
# Pure-JAX reference of the criterion for correctness checks
# ---------------------------------------------------------------------------
def lm_criterion_ref(logp, target, mask, reduction='mean'):
    gathered = jnp.take_along_axis(logp, target[..., None], axis=-1)[..., 0]
    nll = -gathered * mask
    if reduction == 'none':
        return nll.sum(axis=1) / mask.sum(axis=1)
    return jnp.sum(nll) / jnp.sum(mask)


if __name__ == "__main__":
    key = jax.random.PRNGKey(0)
    N, Lp1, V, D, Dfc, A = 2, 9, 128, 32, 16, 4
    L = Lp1 - 1

    kw, kl, kf, ka, km = jax.random.split(key, 5)
    wrapper = LossWrapperPallas(V=V, D=D, Dfc=Dfc, key=kw)

    labels = jax.random.randint(kl, (N, Lp1), 0, V, dtype=jnp.int32)
    labels = labels.at[:, 0].set(0)                       # BOS-style leading 0
    masks = (jax.random.uniform(km, (N, Lp1)) > 0.2).astype(jnp.float32)
    masks = masks.at[:, 0].set(1.0)
    masks = masks.at[:, 1].set(1.0)                       # keep sum(mask) > 0
    fc_feats = jax.random.normal(kf, (N, Dfc), jnp.float32)
    att_feats = jax.random.normal(ka, (N, A, Dfc), jnp.float32)
    att_masks = jnp.ones((N, A), jnp.float32)
    prototypes_text = jnp.zeros((4, D), jnp.float32)
    prototypes_visual = jnp.zeros((4, D), jnp.float32)
    gts = labels[:, 1:]
    gt_indices = jnp.arange(N)

    out = wrapper.forward(prototypes_text, prototypes_visual, fc_feats,
                          att_feats, labels, masks, att_masks, gts,
                          gt_indices, sc_flag=False, struc_flag=False,
                          drop_worst_flag=False)
    loss_fused = jax.block_until_ready(out['loss'])

    target = labels[:, 1:].astype(jnp.int32)
    mask = masks[:, 1:].astype(jnp.float32)

    # Standalone LanguageModelCriterion kernel (the spec module), both
    # reductions, on the materialized log-probs.
    crit = LanguageModelCriterionPallas()
    loss_mean = jax.block_until_ready(
        crit(out['model_output'], target, mask, reduction='mean'))
    loss_none = jax.block_until_ready(
        crit(out['model_output'], target, mask, reduction='none'))

    ref_mean = lm_criterion_ref(out['model_output'], target, mask, 'mean')
    ref_none = lm_criterion_ref(out['model_output'], target, mask, 'none')

    assert jnp.allclose(loss_fused, ref_mean, rtol=1e-5, atol=1e-5), \
        (loss_fused, ref_mean)
    assert jnp.allclose(loss_mean, ref_mean, rtol=1e-5, atol=1e-5), \
        (loss_mean, ref_mean)
    assert jnp.allclose(loss_none, ref_none, rtol=1e-5, atol=1e-5), \
        (loss_none, ref_none)

    print("KERNEL_OK")
</pallas_src>

<mosaic_0001>
module attributes {stable_mosaic.version = 11 : i64} {
  func.func @_fused_xe_kernel(%arg0: i32, %arg1: memref<128x32xbf16, #tpu.memory_space<vmem>>, %arg2: memref<32x128xbf16, #tpu.memory_space<vmem>>, %arg3: memref<1x128xf32, #tpu.memory_space<vmem>>, %arg4: memref<128x1xi32, #tpu.memory_space<vmem>>, %arg5: memref<128x1xf32, #tpu.memory_space<vmem>>, %arg6: memref<128x128xf32, #tpu.memory_space<vmem>>, %arg7: memref<128x1xf32, #tpu.memory_space<vmem>>) attributes {dimension_semantics = [#tpu.dimension_semantics<parallel>], iteration_bounds = array<i64: 1>, scalar_prefetch = 0 : i64, scratch_operands = 0 : i64, tpu.core_type = #tpu.core_type<tc>, window_params = [{transform_indices = @transform_0, window_bounds = array<i64: 128, 32>}, {pipeline_mode = #tpu.pipeline_mode<synchronous>, transform_indices = @transform_1, window_bounds = array<i64: 32, 128>}, {pipeline_mode = #tpu.pipeline_mode<synchronous>, transform_indices = @transform_2, window_bounds = array<i64: 1, 128>}, {transform_indices = @transform_3, window_bounds = array<i64: 128, 1>}, {transform_indices = @transform_4, window_bounds = array<i64: 128, 1>}, {transform_indices = @transform_5, window_bounds = array<i64: 128, 128>}, {transform_indices = @transform_6, window_bounds = array<i64: 128, 1>}]} {
    %c0 = arith.constant 0 : index
    %c0_0 = arith.constant 0 : index
    %0 = vector.load %arg1[%c0, %c0_0] : memref<128x32xbf16, #tpu.memory_space<vmem>>, vector<128x32xbf16>
    %c0_1 = arith.constant 0 : index
    %c0_2 = arith.constant 0 : index
    %1 = vector.load %arg2[%c0_1, %c0_2] : memref<32x128xbf16, #tpu.memory_space<vmem>>, vector<32x128xbf16>
    %cst = arith.constant dense<0.000000e+00> : vector<128x128xf32>
    %2 = tpu.matmul %0, %1, %cst {dimension_numbers = #tpu.dot_dimension_numbers<[1], [0], [0], [1], [0, 0, 1, 1], [], []>} : vector<128x32xbf16>, vector<32x128xbf16>, vector<128x128xf32> -> vector<128x128xf32>
    %c0_3 = arith.constant 0 : index
    %c0_4 = arith.constant 0 : index
    %3 = vector.load %arg3[%c0_3, %c0_4] : memref<1x128xf32, #tpu.memory_space<vmem>>, vector<1x128xf32>
    %4 = vector.broadcast %3 : vector<1x128xf32> to vector<128x128xf32>
    %5 = arith.addf %2, %4 : vector<128x128xf32>
    %cst_5 = arith.constant dense<0xFF800000> : vector<128xf32>
    %6 = vector.multi_reduction <maximumf>, %5, %cst_5 [1] : vector<128x128xf32> to vector<128xf32>
    %7 = vector.shape_cast %6 : vector<128xf32> to vector<128x1xf32>
    %8 = vector.broadcast %7 : vector<128x1xf32> to vector<128x128xf32>
    %9 = arith.subf %5, %8 : vector<128x128xf32>
    %10 = math.exp %9 : vector<128x128xf32>
    %cst_6 = arith.constant dense<0.000000e+00> : vector<128xf32>
    %11 = vector.multi_reduction <add>, %10, %cst_6 [1] : vector<128x128xf32> to vector<128xf32>
    %12 = vector.shape_cast %11 : vector<128xf32> to vector<128x1xf32>
    %13 = math.log %12 : vector<128x1xf32>
    %14 = vector.broadcast %13 : vector<128x1xf32> to vector<128x128xf32>
    %15 = arith.subf %9, %14 : vector<128x128xf32>
    %c0_7 = arith.constant 0 : index
    %c0_8 = arith.constant 0 : index
    %16 = vector.load %arg6[%c0_7, %c0_8] : memref<128x128xf32, #tpu.memory_space<vmem>>, vector<128x128xf32>
    tpu.vector_store %arg6[%c0_7, %c0_8], %15 {strides = array<i32>} : memref<128x128xf32, #tpu.memory_space<vmem>>, vector<128x128xf32>,
    %17 = tpu.iota {dimensions = array<i32: 1>} : vector<128x128xi32>
    %c0_9 = arith.constant 0 : index
    %c0_10 = arith.constant 0 : index
    %18 = vector.load %arg4[%c0_9, %c0_10] : memref<128x1xi32, #tpu.memory_space<vmem>>, vector<128x1xi32>
    %19 = vector.broadcast %18 : vector<128x1xi32> to vector<128x128xi32>
    %20 = arith.cmpi eq, %17, %19 : vector<128x128xi32>
    %cst_11 = arith.constant 0.000000e+00 : f32
    %21 = vector.broadcast %cst_11 : f32 to vector<128x128xf32>
    %22 = arith.select %20, %15, %21 : vector<128x128xi1>, vector<128x128xf32>
    %cst_12 = arith.constant dense<0.000000e+00> : vector<128xf32>
    %23 = vector.multi_reduction <add>, %22, %cst_12 [1] : vector<128x128xf32> to vector<128xf32>
    %24 = vector.shape_cast %23 : vector<128xf32> to vector<128x1xf32>
    %cst_13 = arith.constant 0.000000e+00 : f32
    %25 = vector.broadcast %cst_13 : f32 to vector<128x1xf32>
    %26 = arith.subf %25, %24 : vector<128x1xf32>
    %c0_14 = arith.constant 0 : index
    %c0_15 = arith.constant 0 : index
    %27 = vector.load %arg5[%c0_14, %c0_15] : memref<128x1xf32, #tpu.memory_space<vmem>>, vector<128x1xf32>
    %28 = arith.mulf %26, %27 : vector<128x1xf32>
    %c0_16 = arith.constant 0 : index
    %c0_17 = arith.constant 0 : index
    %29 = vector.load %arg7[%c0_16, %c0_17] : memref<128x1xf32, #tpu.memory_space<vmem>>, vector<128x1xf32>
    tpu.vector_store %arg7[%c0_16, %c0_17], %28 {strides = array<i32>} : memref<128x1xf32, #tpu.memory_space<vmem>>, vector<128x1xf32>,
    return
  }
  func.func @transform_0(%arg0: i32) -> (i32, i32) {
    %c0_i32 = arith.constant 0 : i32
    %c0_i32_0 = arith.constant 0 : i32
    return %arg0, %c0_i32 : i32, i32
  }
  func.func @transform_1(%arg0: i32) -> (i32, i32) {
    %c0_i32 = arith.constant 0 : i32
    %c0_i32_0 = arith.constant 0 : i32
    %c0_i32_1 = arith.constant 0 : i32
    return %c0_i32, %c0_i32_0 : i32, i32
  }
  func.func @transform_2(%arg0: i32) -> (i32, i32) {
    %c0_i32 = arith.constant 0 : i32
    %c0_i32_0 = arith.constant 0 : i32
    %c0_i32_1 = arith.constant 0 : i32
    return %c0_i32, %c0_i32_0 : i32, i32
  }
  func.func @transform_3(%arg0: i32) -> (i32, i32) {
    %c0_i32 = arith.constant 0 : i32
    %c0_i32_0 = arith.constant 0 : i32
    return %arg0, %c0_i32 : i32, i32
  }
  func.func @transform_4(%arg0: i32) -> (i32, i32) {
    %c0_i32 = arith.constant 0 : i32
    %c0_i32_0 = arith.constant 0 : i32
    return %arg0, %c0_i32 : i32, i32
  }
  func.func @transform_5(%arg0: i32) -> (i32, i32) {
    %c0_i32 = arith.constant 0 : i32
    %c0_i32_0 = arith.constant 0 : i32
    return %arg0, %c0_i32 : i32, i32
  }
  func.func @transform_6(%arg0: i32) -> (i32, i32) {
    %c0_i32 = arith.constant 0 : i32
    %c0_i32_0 = arith.constant 0 : i32
    return %arg0, %c0_i32 : i32, i32
  }
}

</mosaic_0001>

<llo_original>
// kernel: tpu_custom_call.1
$region0: #{tpu_custom_call.1}
  #allocation0 [shape = 'u32[]', space=smem, size = 0x4, offset = 0x4, fixed_abs, tag = 'smem constant byte address 0x4 - core index']
  #allocation1 [shape = 'u32[72,128]{1,0:T(1,128)}', space=vmem, size = 0x9000, scoped, tag = 'internal scratch']
  %s0 = inlined_call_operand.vmem [shape: bf16[16,32], index: 0, kind: input, shape index: {}]
  %s1 = inlined_call_operand.vmem [shape: bf16[32,128], index: 1, kind: input, shape index: {}]
  %s2 = inlined_call_operand.vmem [shape: f32[1,128], index: 2, kind: input, shape index: {}]
  %s3 = inlined_call_operand.vmem [shape: s32[16,1], index: 3, kind: input, shape index: {}]
  %s4 = inlined_call_operand.vmem [shape: f32[16,1], index: 4, kind: input, shape index: {}]
  %s5 = inlined_call_operand.hbm [shape: f32[16,128], index: 5, kind: output, shape index: {0}]
  %s6 = inlined_call_operand.vmem [shape: f32[16,1], index: 6, kind: output, shape index: {1}]
  %7 = xla_tuple %s5, %s6
  %s8 = sld [smem:[#allocation0]]
  $region72: #{tpu_custom_call.1} parent=0
    _
  %s10 = ssub.s32 1, %s8
  %s11 = scalar_select 0, %s10, %s8
  $region1: #{tpu_custom_call.1} parent=0
    #allocation2 [shape = 'u8[65536]{0}', space=vmem, size = 0x10000, scoped, tag = 'output window, operand 0, single buffered']
    #allocation3 [shape = 's32[1]{0}', space=sflag, size = 0x4, scoped, tag = 'scoped memory for tpu_custom_call.1']
    #allocation4 [shape = 'u8[65536]{0}', space=vmem, size = 0x10000, scoped, tag = 'output window, operand 1, single buffered']
    %12 = vsyncpa [#allocation3], 0
    // Predicated region
    $region2: #{tpu_custom_call.1} parent=1 // pred_check
      _
    $region3: #{tpu_custom_call.1} parent=1 // pred_check_branch
      %14 = sbr.rel (0) target = $region5
    $region4: #{tpu_custom_call.1} parent=1 // pred_region
      _
    $region5: #{tpu_custom_call.1} parent=1 // pred_fallthru
      _
    // Predicated region
    $region6: #{tpu_custom_call.1} parent=1 // pred_check
      _
    $region7: #{tpu_custom_call.1} parent=1 // pred_check_branch
      %16 = sbr.rel (0) target = $region9
    $region8: #{tpu_custom_call.1} parent=1 // pred_region
      _
    $region9: #{tpu_custom_call.1} parent=1 // pred_fallthru
      _
    // Predicated region
    $region10: #{tpu_custom_call.1} parent=1 // pred_check
      _
    $region11: #{tpu_custom_call.1} parent=1 // pred_check_branch
      %18 = sbr.rel (0) target = $region13
    $region12: #{tpu_custom_call.1} parent=1 // pred_region
      _
    $region13: #{tpu_custom_call.1} parent=1 // pred_fallthru
      _
    // Predicated region
    $region14: #{tpu_custom_call.1} parent=1 // pred_check
      _
    $region15: #{tpu_custom_call.1} parent=1 // pred_check_branch
      %20 = sbr.rel (0) target = $region17
    $region16: #{tpu_custom_call.1} parent=1 // pred_region
      _
    $region17: #{tpu_custom_call.1} parent=1 // pred_fallthru
      _
    // Predicated region
    $region18: #{tpu_custom_call.1} parent=1 // pred_check
      _
    $region19: #{tpu_custom_call.1} parent=1 // pred_check_branch
      %22 = sbr.rel (0) target = $region21
    $region20: #{tpu_custom_call.1} parent=1 // pred_region
      _
    $region21: #{tpu_custom_call.1} parent=1 // pred_fallthru
      _
    %v24 = vld [vmem:[%s0] sm:$0xf]
    %v25 = vld [vmem:[%s0 + $0x4] sm:$0xf]
    %v26 = vld [vmem:[%s0 + $0x8] sm:$0xf]
    %v27 = vld [vmem:[%s0 + $0xc] sm:$0xf]
    %v28 = vld [vmem:[%s0 + $0x10] sm:$0xf]
    %v29 = vld [vmem:[%s0 + $0x14] sm:$0xf]
    %v30 = vld [vmem:[%s0 + $0x18] sm:$0xf]
    %v31 = vld [vmem:[%s0 + $0x1c] sm:$0xf]
    %v32 = vld [vmem:[%s0 + $0x20] sm:$0xf]
    %v33 = vld [vmem:[%s0 + $0x24] sm:$0xf]
    %v34 = vld [vmem:[%s0 + $0x28] sm:$0xf]
    %v35 = vld [vmem:[%s0 + $0x2c] sm:$0xf]
    %v36 = vld [vmem:[%s0 + $0x30] sm:$0xf]
    %v37 = vld [vmem:[%s0 + $0x34] sm:$0xf]
    %v38 = vld [vmem:[%s0 + $0x38] sm:$0xf]
    %v39 = vld [vmem:[%s0 + $0x3c] sm:$0xf]
    %v40 = vld [vmem:[%s1] sm:$0xf]
    %v41 = vld [vmem:[%s1 + $0x4] sm:$0xf]
    %v42 = vld [vmem:[%s1 + $0x8] sm:$0xf]
    %v43 = vld [vmem:[%s1 + $0xc] sm:$0xf]
    %v44 = vld [vmem:[%s2] sm:$0x1]
    %v46 = vperm.slane %v44, 0
    %v64 = vunpack.c.l.b16 %v24
    %v65 = vunpack.c.l.b16 %v25
    %v66 = vunpack.c.l.b16 %v26
    %v67 = vunpack.c.l.b16 %v27
    %v68 = vunpack.c.l.b16 %v28
    %v69 = vunpack.c.l.b16 %v29
    %v70 = vunpack.c.l.b16 %v30
    %v71 = vunpack.c.l.b16 %v31
    %v72 = vunpack.c.l.b16 %v32
    %v73 = vunpack.c.l.b16 %v33
    %v74 = vunpack.c.l.b16 %v34
    %v75 = vunpack.c.l.b16 %v35
    %v76 = vunpack.c.l.b16 %v36
    %v77 = vunpack.c.l.b16 %v37
    %v78 = vunpack.c.l.b16 %v38
    %v79 = vunpack.c.l.b16 %v39
    %v80 = vpack.c.b16 %v65, %v64
    %v81 = vpack.c.b16 %v67, %v66
    %v82 = vpack.c.b16 %v69, %v68
    %v83 = vpack.c.b16 %v71, %v70
    %v84 = vpack.c.b16 %v73, %v72
    %v85 = vpack.c.b16 %v75, %v74
    %v86 = vpack.c.b16 %v77, %v76
    %v87 = vpack.c.b16 %v79, %v78
    %v92 = vunpack.c.l.b16 %v40
    %v93 = vunpack.c.l.b16 %v41
    %v94 = vunpack.c.l.b16 %v42
    %v95 = vunpack.c.l.b16 %v43
    %v96 = vpack.c.b16 %v93, %v92
    %v97 = vpack.c.b16 %v95, %v94
    %vm100 = vcmask 261120
    %v102 = vsel %vm100, %v80, 0
    %v105 = vsel %vm100, %v81, 0
    %v108 = vsel %vm100, %v82, 0
    %v111 = vsel %vm100, %v83, 0
    %v114 = vsel %vm100, %v84, 0
    %v117 = vsel %vm100, %v85, 0
    %v120 = vsel %vm100, %v86, 0
    %v123 = vsel %vm100, %v87, 0
    %125 = vmatpush.bf16.msra.mxu0 0
    %126 = vmatpush.bf16.msra.mxu0 0
    %127 = vmatpush.bf16.msra.mxu0 0
    %128 = vmatpush.bf16.msra.mxu0 0
    %129 = vmatpush.bf16.msra.mxu0 0
    %130 = vmatpush.bf16.msra.mxu0 0
    %131 = vmatpush.bf16.msra.mxu0 %v97
    %132 = vmatpush.bf16.msra.mxu0 %v96
    %133 = vmatmul.bf16.gmra.mxu0 %v102
    %v134 = vpop.f32.mrf.mxu0
    %v135 = vadd.f32 %v46, %v134
    %v136 = vpop.f32.mrf.mxu0
    %v137 = vadd.f32 %v46, %v136
    %138 = vmatmul.bf16.gmra.mxu0 %v105
    %v139 = vpop.f32.mrf.mxu0
    %v140 = vadd.f32 %v46, %v139
    %v141 = vpop.f32.mrf.mxu0
    %v142 = vadd.f32 %v46, %v141
    %143 = vmatmul.bf16.gmra.mxu0 %v108
    %v144 = vpop.f32.mrf.mxu0
    %v145 = vadd.f32 %v46, %v144
    %v146 = vpop.f32.mrf.mxu0
    %v147 = vadd.f32 %v46, %v146
    %148 = vmatmul.bf16.gmra.mxu0 %v111
    %v149 = vpop.f32.mrf.mxu0
    %v150 = vadd.f32 %v46, %v149
    %v151 = vpop.f32.mrf.mxu0
    %v152 = vadd.f32 %v46, %v151
    %153 = vmatmul.bf16.gmra.mxu0 %v114
    %v154 = vpop.f32.mrf.mxu0
    %v155 = vadd.f32 %v46, %v154
    %v156 = vpop.f32.mrf.mxu0
    %v157 = vadd.f32 %v46, %v156
    %158 = vmatmul.bf16.gmra.mxu0 %v117
    %v159 = vpop.f32.mrf.mxu0
    %v160 = vadd.f32 %v46, %v159
    %v161 = vpop.f32.mrf.mxu0
    %v162 = vadd.f32 %v46, %v161
    %163 = vmatmul.bf16.gmra.mxu0 %v120
    %v164 = vpop.f32.mrf.mxu0
    %v165 = vadd.f32 %v46, %v164
    %v166 = vpop.f32.mrf.mxu0
    %v167 = vadd.f32 %v46, %v166
    %168 = vmatmul.bf16.gmra.mxu0 %v123
    %v169 = vpop.f32.mrf.mxu0
    %v170 = vadd.f32 %v46, %v169
    %v171 = vpop.f32.mrf.mxu0
    %v172 = vadd.f32 %v46, %v171
    %173 = vdwg.mxu0
    %174 = vmax.xlane.f32.xlu0 %v135
    %v175 = vpop.xlane.xlu0 %174
    %176 = vmax.xlane.f32.xlu0 %v137
    %v177 = vpop.xlane.xlu0 %176
    %178 = vmax.xlane.f32.xlu0 %v140
    %v179 = vpop.xlane.xlu0 %178
    %180 = vmax.xlane.f32.xlu0 %v142
    %v181 = vpop.xlane.xlu0 %180
    %182 = vmax.xlane.f32.xlu0 %v145
    %v183 = vpop.xlane.xlu0 %182
    %184 = vmax.xlane.f32.xlu0 %v147
    %v185 = vpop.xlane.xlu0 %184
    %186 = vmax.xlane.f32.xlu0 %v150
    %v187 = vpop.xlane.xlu0 %186
    %188 = vmax.xlane.f32.xlu0 %v152
    %v189 = vpop.xlane.xlu0 %188
    %190 = vmax.xlane.f32.xlu0 %v155
    %v191 = vpop.xlane.xlu0 %190
    %192 = vmax.xlane.f32.xlu0 %v157
    %v193 = vpop.xlane.xlu0 %192
    %194 = vmax.xlane.f32.xlu0 %v160
    %v195 = vpop.xlane.xlu0 %194
    %196 = vmax.xlane.f32.xlu0 %v162
    %v197 = vpop.xlane.xlu0 %196
    %198 = vmax.xlane.f32.xlu0 %v165
    %v199 = vpop.xlane.xlu0 %198
    %200 = vmax.xlane.f32.xlu0 %v167
    %v201 = vpop.xlane.xlu0 %200
    %202 = vmax.xlane.f32.xlu0 %v170
    %v203 = vpop.xlane.xlu0 %202
    %204 = vmax.xlane.f32.xlu0 %v172
    %v205 = vpop.xlane.xlu0 %204
    %v206 = vsub.f32 %v135, %v175
    %v207 = vsub.f32 %v137, %v177
    %v208 = vsub.f32 %v140, %v179
    %v209 = vsub.f32 %v142, %v181
    %v210 = vsub.f32 %v145, %v183
    %v211 = vsub.f32 %v147, %v185
    %v212 = vsub.f32 %v150, %v187
    %v213 = vsub.f32 %v152, %v189
    %v214 = vsub.f32 %v155, %v191
    %v215 = vsub.f32 %v157, %v193
    %v216 = vsub.f32 %v160, %v195
    %v217 = vsub.f32 %v162, %v197
    %v218 = vsub.f32 %v165, %v199
    %v219 = vsub.f32 %v167, %v201
    %v220 = vsub.f32 %v170, %v203
    %v221 = vsub.f32 %v172, %v205
    %v222 = vmul.f32 %v206, 1.442695
    %v223 = vpow.pop %v222
    %v224 = vmul.f32 %v207, 1.442695
    %v225 = vpow.pop %v224
    %v226 = vmul.f32 %v208, 1.442695
    %v227 = vpow.pop %v226
    %v228 = vmul.f32 %v209, 1.442695
    %v229 = vpow.pop %v228
    %v230 = vmul.f32 %v210, 1.442695
    %v231 = vpow.pop %v230
    %v232 = vmul.f32 %v211, 1.442695
    %v233 = vpow.pop %v232
    %v234 = vmul.f32 %v212, 1.442695
    %v235 = vpow.pop %v234
    %v236 = vmul.f32 %v213, 1.442695
    %v237 = vpow.pop %v236
    %v238 = vmul.f32 %v214, 1.442695
    %v239 = vpow.pop %v238
    %v240 = vmul.f32 %v215, 1.442695
    %v241 = vpow.pop %v240
    %v242 = vmul.f32 %v216, 1.442695
    %v243 = vpow.pop %v242
    %v244 = vmul.f32 %v217, 1.442695
    %v245 = vpow.pop %v244
    %v246 = vmul.f32 %v218, 1.442695
    %v247 = vpow.pop %v246
    %v248 = vmul.f32 %v219, 1.442695
    %v249 = vpow.pop %v248
    %v250 = vmul.f32 %v220, 1.442695
    %v251 = vpow.pop %v250
    %v252 = vmul.f32 %v221, 1.442695
    %v253 = vpow.pop %v252
    %254 = vadd.xlane.f32.xlu0 %v223
    %v255 = vpop.xlane.xlu0 %254
    %256 = vadd.xlane.f32.xlu0 %v225
    %v257 = vpop.xlane.xlu0 %256
    %258 = vadd.xlane.f32.xlu0 %v227
    %v259 = vpop.xlane.xlu0 %258
    %260 = vadd.xlane.f32.xlu0 %v229
    %v261 = vpop.xlane.xlu0 %260
    %262 = vadd.xlane.f32.xlu0 %v231
    %v263 = vpop.xlane.xlu0 %262
    %264 = vadd.xlane.f32.xlu0 %v233
    %v265 = vpop.xlane.xlu0 %264
    %266 = vadd.xlane.f32.xlu0 %v235
    %v267 = vpop.xlane.xlu0 %266
    %268 = vadd.xlane.f32.xlu0 %v237
    %v269 = vpop.xlane.xlu0 %268
    %270 = vadd.xlane.f32.xlu0 %v239
    %v271 = vpop.xlane.xlu0 %270
    %272 = vadd.xlane.f32.xlu0 %v241
    %v273 = vpop.xlane.xlu0 %272
    %274 = vadd.xlane.f32.xlu0 %v243
    %v275 = vpop.xlane.xlu0 %274
    %276 = vadd.xlane.f32.xlu0 %v245
    %v277 = vpop.xlane.xlu0 %276
    %278 = vadd.xlane.f32.xlu0 %v247
    %v279 = vpop.xlane.xlu0 %278
    %280 = vadd.xlane.f32.xlu0 %v249
    %v281 = vpop.xlane.xlu0 %280
    %282 = vadd.xlane.f32.xlu0 %v251
    %v283 = vpop.xlane.xlu0 %282
    %284 = vadd.xlane.f32.xlu0 %v253
    %v285 = vpop.xlane.xlu0 %284
    %v286 = vlog2.pop %v255
    %v287 = vmul.f32 %v286, 0.6931472
    %v288 = vlog2.pop %v257
    %v289 = vmul.f32 %v288, 0.6931472
    %v290 = vlog2.pop %v259
    %v291 = vmul.f32 %v290, 0.6931472
    %v292 = vlog2.pop %v261
    %v293 = vmul.f32 %v292, 0.6931472
    %v294 = vlog2.pop %v263
    %v295 = vmul.f32 %v294, 0.6931472
    %v296 = vlog2.pop %v265
    %v297 = vmul.f32 %v296, 0.6931472
    %v298 = vlog2.pop %v267
    %v299 = vmul.f32 %v298, 0.6931472
    %v300 = vlog2.pop %v269
    %v301 = vmul.f32 %v300, 0.6931472
    %v302 = vlog2.pop %v271
    %v303 = vmul.f32 %v302, 0.6931472
    %v304 = vlog2.pop %v273
    %v305 = vmul.f32 %v304, 0.6931472
    %v306 = vlog2.pop %v275
    %v307 = vmul.f32 %v306, 0.6931472
    %v308 = vlog2.pop %v277
    %v309 = vmul.f32 %v308, 0.6931472
    %v310 = vlog2.pop %v279
    %v311 = vmul.f32 %v310, 0.6931472
    %v312 = vlog2.pop %v281
    %v313 = vmul.f32 %v312, 0.6931472
    %v314 = vlog2.pop %v283
    %v315 = vmul.f32 %v314, 0.6931472
    %v316 = vlog2.pop %v285
    %v317 = vmul.f32 %v316, 0.6931472
    %v318 = vsub.f32 %v206, %v287
    %v319 = vsub.f32 %v207, %v289
    %v320 = vsub.f32 %v208, %v291
    %v321 = vsub.f32 %v209, %v293
    %v322 = vsub.f32 %v210, %v295
    %v323 = vsub.f32 %v211, %v297
    %v324 = vsub.f32 %v212, %v299
    %v325 = vsub.f32 %v213, %v301
    %v326 = vsub.f32 %v214, %v303
    %v327 = vsub.f32 %v215, %v305
    %v328 = vsub.f32 %v216, %v307
    %v329 = vsub.f32 %v217, %v309
    %v330 = vsub.f32 %v218, %v311
    %v331 = vsub.f32 %v219, %v313
    %v332 = vsub.f32 %v220, %v315
    %v333 = vsub.f32 %v221, %v317
    %334 = vst [vmem:[#allocation2] sm:$0xff] %v318
    %335 = vst [vmem:[#allocation2 + $0x8] sm:$0xff] %v319
    %336 = vst [vmem:[#allocation2 + $0x10] sm:$0xff] %v320
    %337 = vst [vmem:[#allocation2 + $0x18] sm:$0xff] %v321
    %338 = vst [vmem:[#allocation2 + $0x20] sm:$0xff] %v322
    %339 = vst [vmem:[#allocation2 + $0x28] sm:$0xff] %v323
    %340 = vst [vmem:[#allocation2 + $0x30] sm:$0xff] %v324
    %341 = vst [vmem:[#allocation2 + $0x38] sm:$0xff] %v325
    %342 = vst [vmem:[#allocation2 + $0x40] sm:$0xff] %v326
    %343 = vst [vmem:[#allocation2 + $0x48] sm:$0xff] %v327
    %344 = vst [vmem:[#allocation2 + $0x50] sm:$0xff] %v328
    %345 = vst [vmem:[#allocation2 + $0x58] sm:$0xff] %v329
    %346 = vst [vmem:[#allocation2 + $0x60] sm:$0xff] %v330
    %347 = vst [vmem:[#allocation2 + $0x68] sm:$0xff] %v331
    %348 = vst [vmem:[#allocation2 + $0x70] sm:$0xff] %v332
    %349 = vst [vmem:[#allocation2 + $0x78] sm:$0xff] %v333
    %v350 = vlaneseq
    %v351 = vand.u32 %v350, 127
    %v352 = vld [vmem:[%s3] sm:$0xff]
    %v353 = vld [vmem:[%s3 + $0x8] sm:$0xff]
    %v354 = vld [vmem:[%s3 + $0x10] sm:$0xff]
    %v355 = vld [vmem:[%s3 + $0x18] sm:$0xff]
    %v356 = vld [vmem:[%s3 + $0x20] sm:$0xff]
    %v357 = vld [vmem:[%s3 + $0x28] sm:$0xff]
    %v358 = vld [vmem:[%s3 + $0x30] sm:$0xff]
    %v359 = vld [vmem:[%s3 + $0x38] sm:$0xff]
    %v360 = vld [vmem:[%s3 + $0x40] sm:$0xff]
    %v361 = vld [vmem:[%s3 + $0x48] sm:$0xff]
    %v362 = vld [vmem:[%s3 + $0x50] sm:$0xff]
    %v363 = vld [vmem:[%s3 + $0x58] sm:$0xff]
    %v364 = vld [vmem:[%s3 + $0x60] sm:$0xff]
    %v365 = vld [vmem:[%s3 + $0x68] sm:$0xff]
    %v366 = vld [vmem:[%s3 + $0x70] sm:$0xff]
    %v367 = vld [vmem:[%s3 + $0x78] sm:$0xff]
    %368 = vset.pattern.permute.xlu0 0
    %369 = vperm.xlu0 %368, %v352
    %v370 = vpop.permute.xlu0 %369
    %371 = vset.pattern.permute.xlu0 0
    %372 = vperm.xlu0 %371, %v353
    %v373 = vpop.permute.xlu0 %372
    %374 = vset.pattern.permute.xlu0 0
    %375 = vperm.xlu0 %374, %v354
    %v376 = vpop.permute.xlu0 %375
    %377 = vset.pattern.permute.xlu0 0
    %378 = vperm.xlu0 %377, %v355
    %v379 = vpop.permute.xlu0 %378
    %380 = vset.pattern.permute.xlu0 0
    %381 = vperm.xlu0 %380, %v356
    %v382 = vpop.permute.xlu0 %381
    %383 = vset.pattern.permute.xlu0 0
    %384 = vperm.xlu0 %383, %v357
    %v385 = vpop.permute.xlu0 %384
    %386 = vset.pattern.permute.xlu0 0
    %387 = vperm.xlu0 %386, %v358
    %v388 = vpop.permute.xlu0 %387
    %389 = vset.pattern.permute.xlu0 0
    %390 = vperm.xlu0 %389, %v359
    %v391 = vpop.permute.xlu0 %390
    %392 = vset.pattern.permute.xlu0 0
    %393 = vperm.xlu0 %392, %v360
    %v394 = vpop.permute.xlu0 %393
    %395 = vset.pattern.permute.xlu0 0
    %396 = vperm.xlu0 %395, %v361
    %v397 = vpop.permute.xlu0 %396
    %398 = vset.pattern.permute.xlu0 0
    %399 = vperm.xlu0 %398, %v362
    %v400 = vpop.permute.xlu0 %399
    %401 = vset.pattern.permute.xlu0 0
    %402 = vperm.xlu0 %401, %v363
    %v403 = vpop.permute.xlu0 %402
    %404 = vset.pattern.permute.xlu0 0
    %405 = vperm.xlu0 %404, %v364
    %v406 = vpop.permute.xlu0 %405
    %407 = vset.pattern.permute.xlu0 0
    %408 = vperm.xlu0 %407, %v365
    %v409 = vpop.permute.xlu0 %408
    %410 = vset.pattern.permute.xlu0 0
    %411 = vperm.xlu0 %410, %v366
    %v412 = vpop.permute.xlu0 %411
    %413 = vset.pattern.permute.xlu0 0
    %414 = vperm.xlu0 %413, %v367
    %v415 = vpop.permute.xlu0 %414
    %vm416 = vcmp.eq.s32.totalorder %v351, %v370
    %vm417 = vcmp.eq.s32.totalorder %v351, %v373
    %vm418 = vcmp.eq.s32.totalorder %v351, %v376
    %vm419 = vcmp.eq.s32.totalorder %v351, %v379
    %vm420 = vcmp.eq.s32.totalorder %v351, %v382
    %vm421 = vcmp.eq.s32.totalorder %v351, %v385
    %vm422 = vcmp.eq.s32.totalorder %v351, %v388
    %vm423 = vcmp.eq.s32.totalorder %v351, %v391
    %vm424 = vcmp.eq.s32.totalorder %v351, %v394
    %vm425 = vcmp.eq.s32.totalorder %v351, %v397
    %vm426 = vcmp.eq.s32.totalorder %v351, %v400
    %vm427 = vcmp.eq.s32.totalorder %v351, %v403
    %vm428 = vcmp.eq.s32.totalorder %v351, %v406
    %vm429 = vcmp.eq.s32.totalorder %v351, %v409
    %vm430 = vcmp.eq.s32.totalorder %v351, %v412
    %vm431 = vcmp.eq.s32.totalorder %v351, %v415
    %v432 = vsel %vm416, %v318, 0.0
    %v433 = vsel %vm417, %v319, 0.0
    %v434 = vsel %vm418, %v320, 0.0
    %v435 = vsel %vm419, %v321, 0.0
    %v436 = vsel %vm420, %v322, 0.0
    %v437 = vsel %vm421, %v323, 0.0
    %v438 = vsel %vm422, %v324, 0.0
    %v439 = vsel %vm423, %v325, 0.0
    %v440 = vsel %vm424, %v326, 0.0
    %v441 = vsel %vm425, %v327, 0.0
    %v442 = vsel %vm426, %v328, 0.0
    %v443 = vsel %vm427, %v329, 0.0
    %v444 = vsel %vm428, %v330, 0.0
    %v445 = vsel %vm429, %v331, 0.0
    %v446 = vsel %vm430, %v332, 0.0
    %v447 = vsel %vm431, %v333, 0.0
    %448 = vadd.xlane.f32.xlu0 %v432
    %v449 = vpop.xlane.xlu0 %448
    %450 = vadd.xlane.f32.xlu0 %v433
    %v451 = vpop.xlane.xlu0 %450
    %452 = vadd.xlane.f32.xlu0 %v434
    %v453 = vpop.xlane.xlu0 %452
    %454 = vadd.xlane.f32.xlu0 %v435
    %v455 = vpop.xlane.xlu0 %454
    %456 = vadd.xlane.f32.xlu0 %v436
    %v457 = vpop.xlane.xlu0 %456
    %458 = vadd.xlane.f32.xlu0 %v437
    %v459 = vpop.xlane.xlu0 %458
    %460 = vadd.xlane.f32.xlu0 %v438
    %v461 = vpop.xlane.xlu0 %460
    %462 = vadd.xlane.f32.xlu0 %v439
    %v463 = vpop.xlane.xlu0 %462
    %464 = vadd.xlane.f32.xlu0 %v440
    %v465 = vpop.xlane.xlu0 %464
    %466 = vadd.xlane.f32.xlu0 %v441
    %v467 = vpop.xlane.xlu0 %466
    %468 = vadd.xlane.f32.xlu0 %v442
    %v469 = vpop.xlane.xlu0 %468
    %470 = vadd.xlane.f32.xlu0 %v443
    %v471 = vpop.xlane.xlu0 %470
    %472 = vadd.xlane.f32.xlu0 %v444
    %v473 = vpop.xlane.xlu0 %472
    %474 = vadd.xlane.f32.xlu0 %v445
    %v475 = vpop.xlane.xlu0 %474
    %476 = vadd.xlane.f32.xlu0 %v446
    %v477 = vpop.xlane.xlu0 %476
    %478 = vadd.xlane.f32.xlu0 %v447
    %v479 = vpop.xlane.xlu0 %478
    %v480 = vsub.f32 0.0, %v449
    %v481 = vsub.f32 0.0, %v451
    %v482 = vsub.f32 0.0, %v453
    %v483 = vsub.f32 0.0, %v455
    %v484 = vsub.f32 0.0, %v457
    %v485 = vsub.f32 0.0, %v459
    %v486 = vsub.f32 0.0, %v461
    %v487 = vsub.f32 0.0, %v463
    %v488 = vsub.f32 0.0, %v465
    %v489 = vsub.f32 0.0, %v467
    %v490 = vsub.f32 0.0, %v469
    %v491 = vsub.f32 0.0, %v471
    %v492 = vsub.f32 0.0, %v473
    %v493 = vsub.f32 0.0, %v475
    %v494 = vsub.f32 0.0, %v477
    %v495 = vsub.f32 0.0, %v479
    %v496 = vld [vmem:[%s4] sm:$0xff]
    %v497 = vld [vmem:[%s4 + $0x8] sm:$0xff]
    %v498 = vld [vmem:[%s4 + $0x10] sm:$0xff]
    %v499 = vld [vmem:[%s4 + $0x18] sm:$0xff]
    %v500 = vld [vmem:[%s4 + $0x20] sm:$0xff]
    %v501 = vld [vmem:[%s4 + $0x28] sm:$0xff]
    %v502 = vld [vmem:[%s4 + $0x30] sm:$0xff]
    %v503 = vld [vmem:[%s4 + $0x38] sm:$0xff]
    %v504 = vld [vmem:[%s4 + $0x40] sm:$0xff]
    %v505 = vld [vmem:[%s4 + $0x48] sm:$0xff]
    %v506 = vld [vmem:[%s4 + $0x50] sm:$0xff]
    %v507 = vld [vmem:[%s4 + $0x58] sm:$0xff]
    %v508 = vld [vmem:[%s4 + $0x60] sm:$0xff]
    %v509 = vld [vmem:[%s4 + $0x68] sm:$0xff]
    %v510 = vld [vmem:[%s4 + $0x70] sm:$0xff]
    %v511 = vld [vmem:[%s4 + $0x78] sm:$0xff]
    %v512 = vmul.f32 %v480, %v496
    %v513 = vmul.f32 %v481, %v497
    %v514 = vmul.f32 %v482, %v498
    %v515 = vmul.f32 %v483, %v499
    %v516 = vmul.f32 %v484, %v500
    %v517 = vmul.f32 %v485, %v501
    %v518 = vmul.f32 %v486, %v502
    %v519 = vmul.f32 %v487, %v503
    %v520 = vmul.f32 %v488, %v504
    %v521 = vmul.f32 %v489, %v505
    %v522 = vmul.f32 %v490, %v506
    %v523 = vmul.f32 %v491, %v507
    %v524 = vmul.f32 %v492, %v508
    %v525 = vmul.f32 %v493, %v509
    %v526 = vmul.f32 %v494, %v510
    %v527 = vmul.f32 %v495, %v511
    %vm528 = vcmask 7168
    %529 = vst.msk [vmem:[#allocation4] sm:$0xff] %vm528, %v512
    %530 = vst.msk [vmem:[#allocation4 + $0x8] sm:$0xff] %vm528, %v513
    %531 = vst.msk [vmem:[#allocation4 + $0x10] sm:$0xff] %vm528, %v514
    %532 = vst.msk [vmem:[#allocation4 + $0x18] sm:$0xff] %vm528, %v515
    %533 = vst.msk [vmem:[#allocation4 + $0x20] sm:$0xff] %vm528, %v516
    %534 = vst.msk [vmem:[#allocation4 + $0x28] sm:$0xff] %vm528, %v517
    %535 = vst.msk [vmem:[#allocation4 + $0x30] sm:$0xff] %vm528, %v518
    %536 = vst.msk [vmem:[#allocation4 + $0x38] sm:$0xff] %vm528, %v519
    %537 = vst.msk [vmem:[#allocation4 + $0x40] sm:$0xff] %vm528, %v520
    %538 = vst.msk [vmem:[#allocation4 + $0x48] sm:$0xff] %vm528, %v521
    %539 = vst.msk [vmem:[#allocation4 + $0x50] sm:$0xff] %vm528, %v522
    %540 = vst.msk [vmem:[#allocation4 + $0x58] sm:$0xff] %vm528, %v523
    %541 = vst.msk [vmem:[#allocation4 + $0x60] sm:$0xff] %vm528, %v524
    %542 = vst.msk [vmem:[#allocation4 + $0x68] sm:$0xff] %vm528, %v525
    %543 = vst.msk [vmem:[#allocation4 + $0x70] sm:$0xff] %vm528, %v526
    %544 = vst.msk [vmem:[#allocation4 + $0x78] sm:$0xff] %vm528, %v527
    // Predicated region
    $region22: #{tpu_custom_call.1} parent=1 // pred_check
      _
    $region23: #{tpu_custom_call.1} parent=1 // pred_check_branch
      %546 = sbr.rel (0) target = $region25
    $region24: #{tpu_custom_call.1} parent=1 // pred_region
      %548 = vsyncadd [#allocation3], 1792
      %s549 = sshll.u32 [#allocation2], 4
      %s550 = int_to_ptr.vmem [resolvable:$true] %s549
      %s551 = sshll.u32 %s5, 4
      %s552 = int_to_ptr.hbm [resolvable:$true] %s551
      %557 = dma.vmem_to_hbm [thread:$0]  %s550, 256, %s552, [#allocation3], 128, 128, 8
    $region25: #{tpu_custom_call.1} parent=1 // pred_fallthru
      _
    // Predicated region
    $region26: #{tpu_custom_call.1} parent=1 // pred_check
      _
    $region27: #{tpu_custom_call.1} parent=1 // pred_check_branch
      %559 = sbr.rel (0) target = $region29
    $region28: #{tpu_custom_call.1} parent=1 // pred_region
      // Predicated region
      $region30: #{tpu_custom_call.1} parent=28 // pred_check
        _
      $region31: #{tpu_custom_call.1} parent=28 // pred_check_branch
        %561 = sbr.rel (0) target = $region33
      $region32: #{tpu_custom_call.1} parent=28 // pred_region
        // Predicated region
        $region34: #{tpu_custom_call.1} parent=32 // pred_check
          _
        $region35: #{tpu_custom_call.1} parent=32 // pred_check_branch
          %563 = sbr.rel (0) target = $region37
        $region36: #{tpu_custom_call.1} parent=32 // pred_region
          // Predicated region
          $region49: #{tpu_custom_call.1} parent=36 // pred_check
            _
          $region50: #{tpu_custom_call.1} parent=36 // pred_check_branch
            %581 = sbr.rel (0) target = $region52
          $region51: #{tpu_custom_call.1} parent=36 // pred_region
            loop: start=0, step=1, limit=1
            $region53: #{tpu_custom_call.1} parent=51 // loop_pre_header
              _
            $region54: #{tpu_custom_call.1} parent=51 // loop_header
              %s583 = sphi 0, %s587
              %p584 = scmp.ge.s32.totalorder %s583, 1
              %s588 = sphi [#allocation4], [#allocation4]
              %s589 = sphi %s6, %s6
            $region55: #{tpu_custom_call.1} parent=51 // loop_header_branch
              %586 = sbr.rel (%p584) target = $region59
            $region56: #{tpu_custom_call.1} parent=51 // loop_body
              %v590 = vld [vmem:[%s588] sm:$0xff]
              %591 = vst [vmem:[%s589] sm:$0xff] %v590
              %v592 = vld [vmem:[%s588 + $0x8] sm:$0xff]
              %593 = vst [vmem:[%s589 + $0x8] sm:$0xff] %v592
            $region57: #{tpu_custom_call.1} parent=51 // loop_footer
              %s587 = sadd.s32 1, %s583
            $region58: #{tpu_custom_call.1} parent=51 // loop_footer_branch
              %582 = sbr.rel target = $region54
            $region59: #{tpu_custom_call.1} parent=51 // loop_exit
              _
          $region52: #{tpu_custom_call.1} parent=36 // pred_fallthru
            _
          // Predicated region
          $region60: #{tpu_custom_call.1} parent=36 // pred_check
            _
          $region61: #{tpu_custom_call.1} parent=36 // pred_check_branch
            %595 = sbr.rel target = $region63
          $region62: #{tpu_custom_call.1} parent=36 // pred_region
            _
          $region63: #{tpu_custom_call.1} parent=36 // pred_fallthru
            _
        $region37: #{tpu_custom_call.1} parent=32 // pred_fallthru
          _
        // Predicated region
        $region38: #{tpu_custom_call.1} parent=32 // pred_check
          _
        $region39: #{tpu_custom_call.1} parent=32 // pred_check_branch
          %565 = sbr.rel target = $region41
        $region40: #{tpu_custom_call.1} parent=32 // pred_region
          %s567 = ssub.s32 256, 1
          loop: start=0, step=1, limit=1
          $region42: #{tpu_custom_call.1} parent=40 // loop_pre_header
            _
          $region43: #{tpu_custom_call.1} parent=40 // loop_header
            %s569 = sphi 0, %s573
            %p570 = scmp.ge.s32.totalorder %s569, 1
            %s574 = sphi [#allocation4], [#allocation4]
            %s575 = sphi %s6, %s6
          $region44: #{tpu_custom_call.1} parent=40 // loop_header_branch
            %572 = sbr.rel (%p570) target = $region48
          $region45: #{tpu_custom_call.1} parent=40 // loop_body
            %v576 = vld [vmem:[%s574] sm:%s567]
            %577 = vst [vmem:[%s575] sm:%s567] %v576
            %v578 = vld [vmem:[%s574 + $0x8] sm:%s567]
            %579 = vst [vmem:[%s575 + $0x8] sm:%s567] %v578
          $region46: #{tpu_custom_call.1} parent=40 // loop_footer
            %s573 = sadd.s32 1, %s569
          $region47: #{tpu_custom_call.1} parent=40 // loop_footer_branch
            %568 = sbr.rel target = $region43
          $region48: #{tpu_custom_call.1} parent=40 // loop_exit
            _
        $region41: #{tpu_custom_call.1} parent=32 // pred_fallthru
          _
      $region33: #{tpu_custom_call.1} parent=28 // pred_fallthru
        _
      %596 = vnop
    $region29: #{tpu_custom_call.1} parent=1 // pred_fallthru
      _
    // Predicated region
    $region64: #{tpu_custom_call.1} parent=1 // pred_check
      _
    $region65: #{tpu_custom_call.1} parent=1 // pred_check_branch
      %598 = sbr.rel (0) target = $region67
    $region66: #{tpu_custom_call.1} parent=1 // pred_region
      %600 = dma.done [#allocation3], 2048
    $region67: #{tpu_custom_call.1} parent=1 // pred_fallthru
      _
    // Predicated region
    $region68: #{tpu_custom_call.1} parent=1 // pred_check
      _
    $region69: #{tpu_custom_call.1} parent=1 // pred_check_branch
      %602 = sbr.rel (0) target = $region71
    $region70: #{tpu_custom_call.1} parent=1 // pred_region
      _
    $region71: #{tpu_custom_call.1} parent=1 // pred_fallthru
      _
    %603 = vsyncpa [#allocation3], 1

</llo_original>
